<compile_context>
chip_gen: v5e
topology: v5e:2x2
jax: 0.10.0
libtpu: 0.0.40
codegen_flags: <defaults>
</compile_context>

<pallas_src>
import math

import jax
import jax.numpy as jnp
import numpy as np
from jax import lax
from jax.experimental import pallas as pl
from jax.experimental.pallas import tpu as pltpu

PAD_NUM = float(-(2 ** 32) + 1)   # same padding constant as the PyTorch code
LN_EPS = 1e-5                     # nn.LayerNorm default eps


def _make_kernel(num_heads, depth, block_n, causal, compute_dtype):
    H, dep, BN, cdt = num_heads, depth, block_n, compute_dtype
    inv_sqrt_d = 1.0 / math.sqrt(dep)

    def kernel(q_ref, k_ref, v_ref, maskb_ref,
               wq_ref, bq_ref, wk_ref, bk_ref, wv_ref, bv_ref,
               gamma_ref, beta_ref, o_ref):
        _, T, D = q_ref.shape
        q_in = q_ref[...]                        # (BN, T, D) f32 — also the residual source
        q2 = q_in.reshape(BN * T, D)
        k2 = k_ref[...].reshape(BN * T, D)
        v2 = v_ref[...].reshape(BN * T, D)

        # ---- QKV projections: one (BN*T, D) x (D, D) MXU dot each, bf16 in / f32 accumulation.
        q_p = jnp.dot(q2.astype(cdt), wq_ref[...],
                      preferred_element_type=jnp.float32) + bq_ref[...]
        k_p = jnp.dot(k2.astype(cdt), wk_ref[...],
                      preferred_element_type=jnp.float32) + bk_ref[...]
        v_p = jnp.dot(v2.astype(cdt), wv_ref[...],
                      preferred_element_type=jnp.float32) + bv_ref[...]

        # Fold the 1/sqrt(depth) score scale into q (BN*T*D muls instead of H*BN*T*T).
        q_p = q_p * inv_sqrt_d

        # ---- Split heads once: (BN*T, D) -> (H*BN, T, depth), row n = h*BN + b_local.
        def split_heads(x):
            return jnp.concatenate(
                [x[:, h * dep:(h + 1) * dep].reshape(BN, T, dep) for h in range(H)],
                axis=0)

        qh = split_heads(q_p).astype(cdt)
        kh = split_heads(k_p).astype(cdt)
        vh = split_heads(v_p).astype(cdt)

        # ---- One batched QK^T over all (head, batch) pairs -> (H*BN, Tq, Tk), f32 accumulation.
        s = jnp.einsum('nqd,nkd->nqk', qh, kh, preferred_element_type=jnp.float32)

        # Key-padding bias: gathered per (head, batch) and pre-multiplied by PAD_NUM in the
        # wrapper; block view is (H, BN, 1, T) -> (H*BN, 1, T) and broadcasts over the query dim.
        s = s + maskb_ref[...].reshape(H * BN, 1, T)

        if causal:
            row = lax.broadcasted_iota(jnp.int32, (T, T), 0)
            col = lax.broadcasted_iota(jnp.int32, (T, T), 1)
            s = jnp.where((col > row)[None, :, :], PAD_NUM, s)

        # ---- Softmax over keys in f32; normalization applied after P.V via EUP reciprocal.
        m = jnp.max(s, axis=-1, keepdims=True)
        p = jnp.exp(s - m)                                  # (H*BN, Tq, Tk) f32
        l = jnp.sum(p, axis=-1, keepdims=True)              # (H*BN, Tq, 1)  f32

        # TODO(synk): attention / output dropout are identity in eval mode (not emitted).

        # ---- One batched P.V over all (head, batch) pairs -> (H*BN, Tq, depth), f32 acc.
        o_h = jnp.einsum('nqk,nkd->nqd', p.astype(cdt), vh,
                         preferred_element_type=jnp.float32)
        o_h = o_h * pl.reciprocal(l, approx=True)

        # ---- Merge heads on features: (H*BN, T, depth) -> (BN, T, D).
        attn = jnp.concatenate([o_h[h * BN:(h + 1) * BN] for h in range(H)], axis=-1)

        # ---- Residual with ORIGINAL q, LayerNorm (f32), affine scale/shift.
        y = attn + q_in
        mean = jnp.mean(y, axis=-1, keepdims=True)
        var = jnp.mean((y - mean) ** 2, axis=-1, keepdims=True)
        y = (y - mean) * lax.rsqrt(var + LN_EPS)
        o_ref[...] = (y * gamma_ref[...] + beta_ref[...]).astype(o_ref.dtype)

    return kernel


def _pick_block_n(N, T, D, H, max_block=8, vmem_budget=8 * 1024 * 1024):
    """Largest divisor of N (<= max_block) whose per-step working set stays small."""
    best = 1
    for c in range(1, min(N, max_block) + 1):
        if N % c != 0:
            continue
        # rough per-step activation bytes: q/k/v/out f32 tiles + f32 scores + bf16 heads
        bytes_est = c * (4 * T * D * 4 + H * T * T * 4 + 3 * T * D * 2)
        if bytes_est <= vmem_budget:
            best = c
    return best


def multi_head_attention(q, k, v, key_masks, params, *, num_heads,
                         causality=False, matmul_dtype=jnp.bfloat16, block_n=None):
    N, T, D = q.shape
    H = num_heads
    assert D % H == 0
    depth = D // H
    if block_n is None:
        block_n = _pick_block_n(N, T, D, H)
    assert N % block_n == 0

    # Reproduce the PyTorch mask indexing exactly: heads are concatenated along the batch dim
    # (row i = h*N + b) while the mask is repeat_interleave'd, so row i uses
    # key_masks[i // num_heads].  Pre-gather per (head, batch), pre-multiply by PAD_NUM, and lay
    # out as (H, N, 1, T) so a (H, block_n, 1, T) block lines up with the kernel's
    # n = h*block_n + b_local ordering without any in-kernel transpose.
    h_idx = jnp.arange(H)[:, None]
    b_idx = jnp.arange(N)[None, :]
    gather_idx = (h_idx * N + b_idx) // H                                   # (H, N)
    mask_bias = (key_masks.astype(jnp.float32)[gather_idx] * PAD_NUM)[:, :, None, :]  # (H,N,1,T)

    # Weights are pre-transposed (x @ W^T + b) and cast to the matmul dtype in the wrapper
    # (halves their DMA footprint); biases / LN params stay f32.
    wq_t = params["wq_w"].T.astype(matmul_dtype)
    wk_t = params["wk_w"].T.astype(matmul_dtype)
    wv_t = params["wv_w"].T.astype(matmul_dtype)
    bq = params["wq_b"].reshape(1, D).astype(jnp.float32)
    bk = params["wk_b"].reshape(1, D).astype(jnp.float32)
    bv = params["wv_b"].reshape(1, D).astype(jnp.float32)
    gamma = params["ln_gamma"].reshape(1, D).astype(jnp.float32)
    beta = params["ln_beta"].reshape(1, D).astype(jnp.float32)

    per_batch = lambda b: (b, 0, 0)
    mask_map = lambda b: (0, b, 0, 0)
    replicated = lambda b: (0, 0)   # constant blocks -> fetched once, not per step

    grid_spec = pltpu.PrefetchScalarGridSpec(
        num_scalar_prefetch=0,
        grid=(N // block_n,),
        in_specs=[
            pl.BlockSpec((block_n, T, D), per_batch),          # q
            pl.BlockSpec((block_n, T, D), per_batch),          # k
            pl.BlockSpec((block_n, T, D), per_batch),          # v
            pl.BlockSpec((H, block_n, 1, T), mask_map),        # key-mask bias (already * PAD_NUM)
            pl.BlockSpec((D, D), replicated),                  # Wq^T (bf16)
            pl.BlockSpec((1, D), replicated),                  # bq
            pl.BlockSpec((D, D), replicated),                  # Wk^T (bf16)
            pl.BlockSpec((1, D), replicated),                  # bk
            pl.BlockSpec((D, D), replicated),                  # Wv^T (bf16)
            pl.BlockSpec((1, D), replicated),                  # bv
            pl.BlockSpec((1, D), replicated),                  # ln gamma
            pl.BlockSpec((1, D), replicated),                  # ln beta
        ],
        out_specs=pl.BlockSpec((block_n, T, D), per_batch),
    )

    return pl.pallas_call(
        _make_kernel(H, depth, block_n, bool(causality), matmul_dtype),
        out_shape=jax.ShapeDtypeStruct((N, T, D), jnp.float32),
        grid_spec=grid_spec,
        compiler_params=pltpu.CompilerParams(
            dimension_semantics=("parallel",),
            vmem_limit_bytes=32 * 1024 * 1024,
        ),
    )(q, k, v, mask_bias, wq_t, bq, wk_t, bk, wv_t, bv, gamma, beta)


def reference(q, k, v, key_masks, params, *, num_heads, causality=False):
    """Pure-JAX (f32) transcription of the PyTorch forward (eval mode)."""
    N, T, D = q.shape
    H = num_heads

    q_ = q @ params["wq_w"].T + params["wq_b"]
    k_ = k @ params["wk_w"].T + params["wk_b"]
    v_ = v @ params["wv_w"].T + params["wv_b"]

    qh = jnp.concatenate(jnp.split(q_, H, axis=2), axis=0)    # (H*N, T, depth)
    kh = jnp.concatenate(jnp.split(k_, H, axis=2), axis=0)
    vh = jnp.concatenate(jnp.split(v_, H, axis=2), axis=0)

    s = jnp.einsum("btd,bsd->bts", qh, kh) / math.sqrt(D // H)
    km = jnp.repeat(key_masks.astype(jnp.float32), H, axis=0)[:, None, :]   # (H*N,1,T)
    s = s + km * PAD_NUM
    if causality:
        tri = jnp.tril(jnp.ones((T, T), jnp.float32))[None]
        s = jnp.where(tri == 0, PAD_NUM, s)
    a = jax.nn.softmax(s, axis=-1)
    o = jnp.einsum("bts,bsd->btd", a, vh)
    o = jnp.concatenate(jnp.split(o, H, axis=0), axis=2)      # (N, T, D)
    y = o + q
    mean = jnp.mean(y, axis=-1, keepdims=True)
    var = jnp.mean((y - mean) ** 2, axis=-1, keepdims=True)
    y = (y - mean) / jnp.sqrt(var + LN_EPS)
    return y * params["ln_gamma"] + params["ln_beta"]


if __name__ == "__main__":
    N, T, D, H = 2, 8, 32, 4
    key = jax.random.PRNGKey(0)
    ks = jax.random.split(key, 12)

    q = jax.random.normal(ks[0], (N, T, D), jnp.float32)
    k = jax.random.normal(ks[1], (N, T, D), jnp.float32)
    v = jax.random.normal(ks[2], (N, T, D), jnp.float32)

    # key padding mask: 1.0 = masked position
    key_masks = jnp.zeros((N, T), jnp.float32).at[0, -2:].set(1.0).at[1, -1:].set(1.0)

    bound = 1.0 / math.sqrt(D)   # nn.Linear default init range
    params = {
        "wq_w": jax.random.uniform(ks[3], (D, D), jnp.float32, -bound, bound),
        "wq_b": jax.random.uniform(ks[4], (D,), jnp.float32, -bound, bound),
        "wk_w": jax.random.uniform(ks[5], (D, D), jnp.float32, -bound, bound),
        "wk_b": jax.random.uniform(ks[6], (D,), jnp.float32, -bound, bound),
        "wv_w": jax.random.uniform(ks[7], (D, D), jnp.float32, -bound, bound),
        "wv_b": jax.random.uniform(ks[8], (D,), jnp.float32, -bound, bound),
        "ln_gamma": 1.0 + 0.1 * jax.random.normal(ks[9], (D,), jnp.float32),
        "ln_beta": 0.1 * jax.random.normal(ks[10], (D,), jnp.float32),
    }
    # NOTE: self.dense is declared in __init__ but never used in forward(); omitted.
    # edge_fea is accepted but unused by the PyTorch forward; omitted.

    # bf16-matmul kernel vs. f32 reference (mixed-precision tolerance).
    out = multi_head_attention(q, k, v, key_masks, params, num_heads=H, causality=False)
    out = jax.block_until_ready(out)
    ref = reference(q, k, v, key_masks, params, num_heads=H, causality=False)
    np.testing.assert_allclose(np.asarray(out), np.asarray(ref), atol=2e-2, rtol=2e-2)

    # causal path
    out_c = multi_head_attention(q, k, v, key_masks, params, num_heads=H, causality=True)
    out_c = jax.block_until_ready(out_c)
    ref_c = reference(q, k, v, key_masks, params, num_heads=H, causality=True)
    np.testing.assert_allclose(np.asarray(out_c), np.asarray(ref_c), atol=2e-2, rtol=2e-2)

    print("KERNEL_OK")
</pallas_src>

<mosaic_0001>
module attributes {stable_mosaic.version = 11 : i64} {
  func.func @kernel(%arg0: i32, %arg1: memref<2x8x32xf32, #tpu.memory_space<vmem>>, %arg2: memref<2x8x32xf32, #tpu.memory_space<vmem>>, %arg3: memref<2x8x32xf32, #tpu.memory_space<vmem>>, %arg4: memref<4x2x1x8xf32, #tpu.memory_space<vmem>>, %arg5: memref<32x32xbf16, #tpu.memory_space<vmem>>, %arg6: memref<1x32xf32, #tpu.memory_space<vmem>>, %arg7: memref<32x32xbf16, #tpu.memory_space<vmem>>, %arg8: memref<1x32xf32, #tpu.memory_space<vmem>>, %arg9: memref<32x32xbf16, #tpu.memory_space<vmem>>, %arg10: memref<1x32xf32, #tpu.memory_space<vmem>>, %arg11: memref<1x32xf32, #tpu.memory_space<vmem>>, %arg12: memref<1x32xf32, #tpu.memory_space<vmem>>, %arg13: memref<2x8x32xf32, #tpu.memory_space<vmem>>) attributes {dimension_semantics = [#tpu.dimension_semantics<parallel>], iteration_bounds = array<i64: 1>, scalar_prefetch = 0 : i64, scratch_operands = 0 : i64, tpu.core_type = #tpu.core_type<tc>, window_params = [{transform_indices = @transform_0, window_bounds = array<i64: 2, 8, 32>}, {transform_indices = @transform_1, window_bounds = array<i64: 2, 8, 32>}, {transform_indices = @transform_2, window_bounds = array<i64: 2, 8, 32>}, {transform_indices = @transform_3, window_bounds = array<i64: 4, 2, 1, 8>}, {pipeline_mode = #tpu.pipeline_mode<synchronous>, transform_indices = @transform_4, window_bounds = array<i64: 32, 32>}, {pipeline_mode = #tpu.pipeline_mode<synchronous>, transform_indices = @transform_5, window_bounds = array<i64: 1, 32>}, {pipeline_mode = #tpu.pipeline_mode<synchronous>, transform_indices = @transform_6, window_bounds = array<i64: 32, 32>}, {pipeline_mode = #tpu.pipeline_mode<synchronous>, transform_indices = @transform_7, window_bounds = array<i64: 1, 32>}, {pipeline_mode = #tpu.pipeline_mode<synchronous>, transform_indices = @transform_8, window_bounds = array<i64: 32, 32>}, {pipeline_mode = #tpu.pipeline_mode<synchronous>, transform_indices = @transform_9, window_bounds = array<i64: 1, 32>}, {pipeline_mode = #tpu.pipeline_mode<synchronous>, transform_indices = @transform_10, window_bounds = array<i64: 1, 32>}, {pipeline_mode = #tpu.pipeline_mode<synchronous>, transform_indices = @transform_11, window_bounds = array<i64: 1, 32>}, {transform_indices = @transform_12, window_bounds = array<i64: 2, 8, 32>}]} {
    %c0 = arith.constant 0 : index
    %c0_0 = arith.constant 0 : index
    %c0_1 = arith.constant 0 : index
    %0 = vector.load %arg1[%c0, %c0_0, %c0_1] : memref<2x8x32xf32, #tpu.memory_space<vmem>>, vector<2x8x32xf32>
    %1 = vector.shape_cast %0 : vector<2x8x32xf32> to vector<16x32xf32>
    %c0_2 = arith.constant 0 : index
    %c0_3 = arith.constant 0 : index
    %c0_4 = arith.constant 0 : index
    %2 = vector.load %arg2[%c0_2, %c0_3, %c0_4] : memref<2x8x32xf32, #tpu.memory_space<vmem>>, vector<2x8x32xf32>
    %3 = vector.shape_cast %2 : vector<2x8x32xf32> to vector<16x32xf32>
    %c0_5 = arith.constant 0 : index
    %c0_6 = arith.constant 0 : index
    %c0_7 = arith.constant 0 : index
    %4 = vector.load %arg3[%c0_5, %c0_6, %c0_7] : memref<2x8x32xf32, #tpu.memory_space<vmem>>, vector<2x8x32xf32>
    %5 = vector.shape_cast %4 : vector<2x8x32xf32> to vector<16x32xf32>
    %6 = arith.truncf %1 : vector<16x32xf32> to vector<16x32xbf16>
    %c0_8 = arith.constant 0 : index
    %c0_9 = arith.constant 0 : index
    %7 = vector.load %arg5[%c0_8, %c0_9] : memref<32x32xbf16, #tpu.memory_space<vmem>>, vector<32x32xbf16>
    %cst = arith.constant dense<0.000000e+00> : vector<16x32xf32>
    %8 = tpu.matmul %6, %7, %cst {dimension_numbers = #tpu.dot_dimension_numbers<[1], [0], [0], [1], [0, 0, 1, 1], [], []>} : vector<16x32xbf16>, vector<32x32xbf16>, vector<16x32xf32> -> vector<16x32xf32>
    %c0_10 = arith.constant 0 : index
    %c0_11 = arith.constant 0 : index
    %9 = vector.load %arg6[%c0_10, %c0_11] : memref<1x32xf32, #tpu.memory_space<vmem>>, vector<1x32xf32>
    %10 = vector.broadcast %9 : vector<1x32xf32> to vector<16x32xf32>
    %11 = arith.addf %8, %10 : vector<16x32xf32>
    %12 = arith.truncf %3 : vector<16x32xf32> to vector<16x32xbf16>
    %c0_12 = arith.constant 0 : index
    %c0_13 = arith.constant 0 : index
    %13 = vector.load %arg7[%c0_12, %c0_13] : memref<32x32xbf16, #tpu.memory_space<vmem>>, vector<32x32xbf16>
    %cst_14 = arith.constant dense<0.000000e+00> : vector<16x32xf32>
    %14 = tpu.matmul %12, %13, %cst_14 {dimension_numbers = #tpu.dot_dimension_numbers<[1], [0], [0], [1], [0, 0, 1, 1], [], []>} : vector<16x32xbf16>, vector<32x32xbf16>, vector<16x32xf32> -> vector<16x32xf32>
    %c0_15 = arith.constant 0 : index
    %c0_16 = arith.constant 0 : index
    %15 = vector.load %arg8[%c0_15, %c0_16] : memref<1x32xf32, #tpu.memory_space<vmem>>, vector<1x32xf32>
    %16 = vector.broadcast %15 : vector<1x32xf32> to vector<16x32xf32>
    %17 = arith.addf %14, %16 : vector<16x32xf32>
    %18 = arith.truncf %5 : vector<16x32xf32> to vector<16x32xbf16>
    %c0_17 = arith.constant 0 : index
    %c0_18 = arith.constant 0 : index
    %19 = vector.load %arg9[%c0_17, %c0_18] : memref<32x32xbf16, #tpu.memory_space<vmem>>, vector<32x32xbf16>
    %cst_19 = arith.constant dense<0.000000e+00> : vector<16x32xf32>
    %20 = tpu.matmul %18, %19, %cst_19 {dimension_numbers = #tpu.dot_dimension_numbers<[1], [0], [0], [1], [0, 0, 1, 1], [], []>} : vector<16x32xbf16>, vector<32x32xbf16>, vector<16x32xf32> -> vector<16x32xf32>
    %c0_20 = arith.constant 0 : index
    %c0_21 = arith.constant 0 : index
    %21 = vector.load %arg10[%c0_20, %c0_21] : memref<1x32xf32, #tpu.memory_space<vmem>>, vector<1x32xf32>
    %22 = vector.broadcast %21 : vector<1x32xf32> to vector<16x32xf32>
    %23 = arith.addf %20, %22 : vector<16x32xf32>
    %cst_22 = arith.constant 0.353553385 : f32
    %24 = vector.broadcast %cst_22 : f32 to vector<16x32xf32>
    %25 = arith.mulf %11, %24 : vector<16x32xf32>
    %26 = vector.extract_strided_slice %25 {offsets = [0, 0], sizes = [16, 8], strides = [1, 1]} : vector<16x32xf32> to vector<16x8xf32>
    %27 = vector.shape_cast %26 : vector<16x8xf32> to vector<2x8x8xf32>
    %28 = vector.extract_strided_slice %25 {offsets = [0, 8], sizes = [16, 8], strides = [1, 1]} : vector<16x32xf32> to vector<16x8xf32>
    %29 = vector.shape_cast %28 : vector<16x8xf32> to vector<2x8x8xf32>
    %30 = vector.extract_strided_slice %25 {offsets = [0, 16], sizes = [16, 8], strides = [1, 1]} : vector<16x32xf32> to vector<16x8xf32>
    %31 = vector.shape_cast %30 : vector<16x8xf32> to vector<2x8x8xf32>
    %32 = vector.extract_strided_slice %25 {offsets = [0, 24], sizes = [16, 8], strides = [1, 1]} : vector<16x32xf32> to vector<16x8xf32>
    %33 = vector.shape_cast %32 : vector<16x8xf32> to vector<2x8x8xf32>
    %34 = tpu.concatenate %27, %29, %31, %33 in 0 : vector<2x8x8xf32>, vector<2x8x8xf32>, vector<2x8x8xf32>, vector<2x8x8xf32> -> vector<8x8x8xf32>
    %35 = arith.truncf %34 : vector<8x8x8xf32> to vector<8x8x8xbf16>
    %36 = vector.extract_strided_slice %17 {offsets = [0, 0], sizes = [16, 8], strides = [1, 1]} : vector<16x32xf32> to vector<16x8xf32>
    %37 = vector.shape_cast %36 : vector<16x8xf32> to vector<2x8x8xf32>
    %38 = vector.extract_strided_slice %17 {offsets = [0, 8], sizes = [16, 8], strides = [1, 1]} : vector<16x32xf32> to vector<16x8xf32>
    %39 = vector.shape_cast %38 : vector<16x8xf32> to vector<2x8x8xf32>
    %40 = vector.extract_strided_slice %17 {offsets = [0, 16], sizes = [16, 8], strides = [1, 1]} : vector<16x32xf32> to vector<16x8xf32>
    %41 = vector.shape_cast %40 : vector<16x8xf32> to vector<2x8x8xf32>
    %42 = vector.extract_strided_slice %17 {offsets = [0, 24], sizes = [16, 8], strides = [1, 1]} : vector<16x32xf32> to vector<16x8xf32>
    %43 = vector.shape_cast %42 : vector<16x8xf32> to vector<2x8x8xf32>
    %44 = tpu.concatenate %37, %39, %41, %43 in 0 : vector<2x8x8xf32>, vector<2x8x8xf32>, vector<2x8x8xf32>, vector<2x8x8xf32> -> vector<8x8x8xf32>
    %45 = arith.truncf %44 : vector<8x8x8xf32> to vector<8x8x8xbf16>
    %46 = vector.extract_strided_slice %23 {offsets = [0, 0], sizes = [16, 8], strides = [1, 1]} : vector<16x32xf32> to vector<16x8xf32>
    %47 = vector.shape_cast %46 : vector<16x8xf32> to vector<2x8x8xf32>
    %48 = vector.extract_strided_slice %23 {offsets = [0, 8], sizes = [16, 8], strides = [1, 1]} : vector<16x32xf32> to vector<16x8xf32>
    %49 = vector.shape_cast %48 : vector<16x8xf32> to vector<2x8x8xf32>
    %50 = vector.extract_strided_slice %23 {offsets = [0, 16], sizes = [16, 8], strides = [1, 1]} : vector<16x32xf32> to vector<16x8xf32>
    %51 = vector.shape_cast %50 : vector<16x8xf32> to vector<2x8x8xf32>
    %52 = vector.extract_strided_slice %23 {offsets = [0, 24], sizes = [16, 8], strides = [1, 1]} : vector<16x32xf32> to vector<16x8xf32>
    %53 = vector.shape_cast %52 : vector<16x8xf32> to vector<2x8x8xf32>
    %54 = tpu.concatenate %47, %49, %51, %53 in 0 : vector<2x8x8xf32>, vector<2x8x8xf32>, vector<2x8x8xf32>, vector<2x8x8xf32> -> vector<8x8x8xf32>
    %55 = arith.truncf %54 : vector<8x8x8xf32> to vector<8x8x8xbf16>
    "tpu.trace_start"() <{level = 10 : i32, message = "nqd,nkd->nqk"}> : () -> ()
    %cst_23 = arith.constant dense<0.000000e+00> : vector<8x8x8xf32>
    %56 = tpu.matmul %35, %45, %cst_23 {dimension_numbers = #tpu.dot_dimension_numbers<[2], [2], [1], [1], [0, 0, 0, 1, 1, 1], [0], [0]>} : vector<8x8x8xbf16>, vector<8x8x8xbf16>, vector<8x8x8xf32> -> vector<8x8x8xf32>
    "tpu.trace_stop"() : () -> ()
    %c0_24 = arith.constant 0 : index
    %c0_25 = arith.constant 0 : index
    %c0_26 = arith.constant 0 : index
    %c0_27 = arith.constant 0 : index
    %57 = vector.load %arg4[%c0_24, %c0_25, %c0_26, %c0_27] : memref<4x2x1x8xf32, #tpu.memory_space<vmem>>, vector<4x2x1x8xf32>
    %58 = vector.shape_cast %57 : vector<4x2x1x8xf32> to vector<8x1x8xf32>
    %59 = vector.broadcast %58 : vector<8x1x8xf32> to vector<8x8x8xf32>
    %60 = arith.addf %56, %59 : vector<8x8x8xf32>
    %cst_28 = arith.constant dense<0xFF800000> : vector<8x8xf32>
    %61 = vector.multi_reduction <maximumf>, %60, %cst_28 [2] : vector<8x8x8xf32> to vector<8x8xf32>
    %62 = vector.shape_cast %61 : vector<8x8xf32> to vector<8x8x1xf32>
    %63 = vector.broadcast %62 : vector<8x8x1xf32> to vector<8x8x8xf32>
    %64 = arith.subf %60, %63 : vector<8x8x8xf32>
    %65 = math.exp %64 : vector<8x8x8xf32>
    %cst_29 = arith.constant dense<0.000000e+00> : vector<8x8xf32>
    %66 = vector.multi_reduction <add>, %65, %cst_29 [2] : vector<8x8x8xf32> to vector<8x8xf32>
    %67 = vector.shape_cast %66 : vector<8x8xf32> to vector<8x8x1xf32>
    %68 = arith.truncf %65 : vector<8x8x8xf32> to vector<8x8x8xbf16>
    "tpu.trace_start"() <{level = 10 : i32, message = "nqk,nkd->nqd"}> : () -> ()
    %cst_30 = arith.constant dense<0.000000e+00> : vector<8x8x8xf32>
    %69 = tpu.matmul %68, %55, %cst_30 {dimension_numbers = #tpu.dot_dimension_numbers<[2], [1], [1], [2], [0, 0, 0, 1, 1, 2], [0], [0]>} : vector<8x8x8xbf16>, vector<8x8x8xbf16>, vector<8x8x8xf32> -> vector<8x8x8xf32>
    "tpu.trace_stop"() : () -> ()
    %70 = tpu.reciprocal %67 {approx = true} : vector<8x8x1xf32> -> vector<8x8x1xf32>
    %71 = vector.broadcast %70 : vector<8x8x1xf32> to vector<8x8x8xf32>
    %72 = arith.mulf %69, %71 : vector<8x8x8xf32>
    %73 = vector.extract_strided_slice %72 {offsets = [0, 0, 0], sizes = [2, 8, 8], strides = [1, 1, 1]} : vector<8x8x8xf32> to vector<2x8x8xf32>
    %74 = vector.extract_strided_slice %72 {offsets = [2, 0, 0], sizes = [2, 8, 8], strides = [1, 1, 1]} : vector<8x8x8xf32> to vector<2x8x8xf32>
    %75 = vector.extract_strided_slice %72 {offsets = [4, 0, 0], sizes = [2, 8, 8], strides = [1, 1, 1]} : vector<8x8x8xf32> to vector<2x8x8xf32>
    %76 = vector.extract_strided_slice %72 {offsets = [6, 0, 0], sizes = [2, 8, 8], strides = [1, 1, 1]} : vector<8x8x8xf32> to vector<2x8x8xf32>
    %77 = tpu.concatenate %73, %74, %75, %76 in 2 : vector<2x8x8xf32>, vector<2x8x8xf32>, vector<2x8x8xf32>, vector<2x8x8xf32> -> vector<2x8x32xf32>
    %78 = arith.addf %77, %0 : vector<2x8x32xf32>
    %cst_31 = arith.constant dense<0.000000e+00> : vector<2x8xf32>
    %79 = vector.multi_reduction <add>, %78, %cst_31 [2] : vector<2x8x32xf32> to vector<2x8xf32>
    %80 = vector.shape_cast %79 : vector<2x8xf32> to vector<2x8x1xf32>
    %cst_32 = arith.constant 3.200000e+01 : f32
    %81 = vector.broadcast %cst_32 : f32 to vector<2x8x1xf32>
    %82 = arith.divf %80, %81 : vector<2x8x1xf32>
    %83 = vector.broadcast %82 : vector<2x8x1xf32> to vector<2x8x32xf32>
    %84 = arith.subf %78, %83 : vector<2x8x32xf32>
    %85 = arith.mulf %84, %84 : vector<2x8x32xf32>
    %cst_33 = arith.constant dense<0.000000e+00> : vector<2x8xf32>
    %86 = vector.multi_reduction <add>, %85, %cst_33 [2] : vector<2x8x32xf32> to vector<2x8xf32>
    %87 = vector.shape_cast %86 : vector<2x8xf32> to vector<2x8x1xf32>
    %cst_34 = arith.constant 3.200000e+01 : f32
    %88 = vector.broadcast %cst_34 : f32 to vector<2x8x1xf32>
    %89 = arith.divf %87, %88 : vector<2x8x1xf32>
    %90 = vector.broadcast %82 : vector<2x8x1xf32> to vector<2x8x32xf32>
    %91 = arith.subf %78, %90 : vector<2x8x32xf32>
    %cst_35 = arith.constant 9.99999974E-6 : f32
    %92 = vector.broadcast %cst_35 : f32 to vector<2x8x1xf32>
    %93 = arith.addf %89, %92 : vector<2x8x1xf32>
    %94 = math.rsqrt %93 : vector<2x8x1xf32>
    %95 = vector.broadcast %94 : vector<2x8x1xf32> to vector<2x8x32xf32>
    %96 = arith.mulf %91, %95 : vector<2x8x32xf32>
    %c0_36 = arith.constant 0 : index
    %c0_37 = arith.constant 0 : index
    %97 = vector.load %arg11[%c0_36, %c0_37] : memref<1x32xf32, #tpu.memory_space<vmem>>, vector<1x32xf32>
    %98 = vector.shape_cast %97 : vector<1x32xf32> to vector<1x1x32xf32>
    %99 = vector.broadcast %98 : vector<1x1x32xf32> to vector<2x8x32xf32>
    %100 = arith.mulf %96, %99 : vector<2x8x32xf32>
    %c0_38 = arith.constant 0 : index
    %c0_39 = arith.constant 0 : index
    %101 = vector.load %arg12[%c0_38, %c0_39] : memref<1x32xf32, #tpu.memory_space<vmem>>, vector<1x32xf32>
    %102 = vector.shape_cast %101 : vector<1x32xf32> to vector<1x1x32xf32>
    %103 = vector.broadcast %102 : vector<1x1x32xf32> to vector<2x8x32xf32>
    %104 = arith.addf %100, %103 : vector<2x8x32xf32>
    %c0_40 = arith.constant 0 : index
    %c0_41 = arith.constant 0 : index
    %c0_42 = arith.constant 0 : index
    %105 = vector.load %arg13[%c0_40, %c0_41, %c0_42] : memref<2x8x32xf32, #tpu.memory_space<vmem>>, vector<2x8x32xf32>
    tpu.vector_store %arg13[%c0_40, %c0_41, %c0_42], %104 {strides = array<i32>} : memref<2x8x32xf32, #tpu.memory_space<vmem>>, vector<2x8x32xf32>,
    return
  }
  func.func @transform_0(%arg0: i32) -> (i32, i32, i32) {
    %c0_i32 = arith.constant 0 : i32
    %c0_i32_0 = arith.constant 0 : i32
    %c0_i32_1 = arith.constant 0 : i32
    return %arg0, %c0_i32, %c0_i32_0 : i32, i32, i32
  }
  func.func @transform_1(%arg0: i32) -> (i32, i32, i32) {
    %c0_i32 = arith.constant 0 : i32
    %c0_i32_0 = arith.constant 0 : i32
    %c0_i32_1 = arith.constant 0 : i32
    return %arg0, %c0_i32, %c0_i32_0 : i32, i32, i32
  }
  func.func @transform_2(%arg0: i32) -> (i32, i32, i32) {
    %c0_i32 = arith.constant 0 : i32
    %c0_i32_0 = arith.constant 0 : i32
    %c0_i32_1 = arith.constant 0 : i32
    return %arg0, %c0_i32, %c0_i32_0 : i32, i32, i32
  }
  func.func @transform_3(%arg0: i32) -> (i32, i32, i32, i32) {
    %c0_i32 = arith.constant 0 : i32
    %c0_i32_0 = arith.constant 0 : i32
    %c0_i32_1 = arith.constant 0 : i32
    %c0_i32_2 = arith.constant 0 : i32
    return %c0_i32, %arg0, %c0_i32_0, %c0_i32_1 : i32, i32, i32, i32
  }
  func.func @transform_4(%arg0: i32) -> (i32, i32) {
    %c0_i32 = arith.constant 0 : i32
    %c0_i32_0 = arith.constant 0 : i32
    %c0_i32_1 = arith.constant 0 : i32
    return %c0_i32, %c0_i32_0 : i32, i32
  }
  func.func @transform_5(%arg0: i32) -> (i32, i32) {
    %c0_i32 = arith.constant 0 : i32
    %c0_i32_0 = arith.constant 0 : i32
    %c0_i32_1 = arith.constant 0 : i32
    return %c0_i32, %c0_i32_0 : i32, i32
  }
  func.func @transform_6(%arg0: i32) -> (i32, i32) {
    %c0_i32 = arith.constant 0 : i32
    %c0_i32_0 = arith.constant 0 : i32
    %c0_i32_1 = arith.constant 0 : i32
    return %c0_i32, %c0_i32_0 : i32, i32
  }
  func.func @transform_7(%arg0: i32) -> (i32, i32) {
    %c0_i32 = arith.constant 0 : i32
    %c0_i32_0 = arith.constant 0 : i32
    %c0_i32_1 = arith.constant 0 : i32
    return %c0_i32, %c0_i32_0 : i32, i32
  }
  func.func @transform_8(%arg0: i32) -> (i32, i32) {
    %c0_i32 = arith.constant 0 : i32
    %c0_i32_0 = arith.constant 0 : i32
    %c0_i32_1 = arith.constant 0 : i32
    return %c0_i32, %c0_i32_0 : i32, i32
  }
  func.func @transform_9(%arg0: i32) -> (i32, i32) {
    %c0_i32 = arith.constant 0 : i32
    %c0_i32_0 = arith.constant 0 : i32
    %c0_i32_1 = arith.constant 0 : i32
    return %c0_i32, %c0_i32_0 : i32, i32
  }
  func.func @transform_10(%arg0: i32) -> (i32, i32) {
    %c0_i32 = arith.constant 0 : i32
    %c0_i32_0 = arith.constant 0 : i32
    %c0_i32_1 = arith.constant 0 : i32
    return %c0_i32, %c0_i32_0 : i32, i32
  }
  func.func @transform_11(%arg0: i32) -> (i32, i32) {
    %c0_i32 = arith.constant 0 : i32
    %c0_i32_0 = arith.constant 0 : i32
    %c0_i32_1 = arith.constant 0 : i32
    return %c0_i32, %c0_i32_0 : i32, i32
  }
  func.func @transform_12(%arg0: i32) -> (i32, i32, i32) {
    %c0_i32 = arith.constant 0 : i32
    %c0_i32_0 = arith.constant 0 : i32
    %c0_i32_1 = arith.constant 0 : i32
    return %arg0, %c0_i32, %c0_i32_0 : i32, i32, i32
  }
}

</mosaic_0001>

<llo_original>
// kernel: tpu_custom_call.1
$region0: #{tpu_custom_call.1}
  #allocation0 [shape = 'u32[]', space=smem, size = 0x4, offset = 0x4, fixed_abs, tag = 'smem constant byte address 0x4 - core index']
  #allocation1 [shape = 'u32[72,128]{1,0:T(1,128)}', space=vmem, size = 0x9000, scoped, tag = 'internal scratch']
  %s0 = inlined_call_operand.hbm [shape: f32[2,8,32], index: 0, kind: input, shape index: {}]
  %s1 = inlined_call_operand.hbm [shape: f32[2,8,32], index: 1, kind: input, shape index: {}]
  %s2 = inlined_call_operand.hbm [shape: f32[2,8,32], index: 2, kind: input, shape index: {}]
  %s3 = inlined_call_operand.hbm [shape: f32[4,2,1,8], index: 3, kind: input, shape index: {}]
  %s4 = inlined_call_operand.hbm [shape: bf16[32,32], index: 4, kind: input, shape index: {}]
  %s5 = inlined_call_operand.vmem [shape: f32[1,32], index: 5, kind: input, shape index: {}]
  %s6 = inlined_call_operand.hbm [shape: bf16[32,32], index: 6, kind: input, shape index: {}]
  %s7 = inlined_call_operand.vmem [shape: f32[1,32], index: 7, kind: input, shape index: {}]
  %s8 = inlined_call_operand.hbm [shape: bf16[32,32], index: 8, kind: input, shape index: {}]
  %s9 = inlined_call_operand.vmem [shape: f32[1,32], index: 9, kind: input, shape index: {}]
  %s10 = inlined_call_operand.vmem [shape: f32[1,32], index: 10, kind: input, shape index: {}]
  %s11 = inlined_call_operand.vmem [shape: f32[1,32], index: 11, kind: input, shape index: {}]
  %s12 = inlined_call_operand.hbm [shape: f32[2,8,32], index: 12, kind: output, shape index: {}]
  %s13 = sld [smem:[#allocation0]]
  $region86: #{tpu_custom_call.1} parent=0
    _
  %s15 = ssub.s32 1, %s13
  %s16 = scalar_select 0, %s15, %s13
  $region1: #{tpu_custom_call.1} parent=0
    #allocation2 [shape = 'u8[8192]{0}', space=vmem, size = 0x2000, scoped, tag = 'input window, operand 0, single buffered']
    #allocation3 [shape = 's32[1]{0}', space=sflag, size = 0x4, scoped, tag = 'scoped memory for tpu_custom_call.1']
    #allocation4 [shape = 's32[1]{0}', space=sflag, size = 0x4, scoped, tag = 'scoped memory for tpu_custom_call.1']
    #allocation5 [shape = 'u8[8192]{0}', space=vmem, size = 0x2000, scoped, tag = 'input window, operand 1, single buffered']
    #allocation6 [shape = 's32[1]{0}', space=sflag, size = 0x4, scoped, tag = 'scoped memory for tpu_custom_call.1']
    #allocation7 [shape = 'u8[8192]{0}', space=vmem, size = 0x2000, scoped, tag = 'input window, operand 2, single buffered']
    #allocation8 [shape = 'u8[4096]{0}', space=vmem, size = 0x1000, scoped, tag = 'input window, operand 3, single buffered']
    #allocation9 [shape = 's32[1]{0}', space=sflag, size = 0x4, scoped, tag = 'scoped memory for tpu_custom_call.1']
    #allocation10 [shape = 'u8[8192]{0}', space=vmem, size = 0x2000, scoped, tag = 'input window, operand 4, single buffered']
    #allocation11 [shape = 'u8[8192]{0}', space=vmem, size = 0x2000, scoped, tag = 'input window, operand 6, single buffered']
    #allocation12 [shape = 's32[1]{0}', space=sflag, size = 0x4, scoped, tag = 'scoped memory for tpu_custom_call.1']
    #allocation13 [shape = 'u8[8192]{0}', space=vmem, size = 0x2000, scoped, tag = 'input window, operand 8, single buffered']
    #allocation14 [shape = 'u8[8192]{0}', space=vmem, size = 0x2000, scoped, tag = 'output window, operand 0, single buffered']
    %17 = vsyncpa [#allocation3], 0
    %18 = vsyncpa [#allocation6], 0
    %19 = vsyncpa [#allocation9], 0
    %20 = vsyncpa [#allocation12], 0
    %21 = vsyncpa [#allocation4], 0
    // Predicated region
    $region2: #{tpu_custom_call.1} parent=1 // pred_check
      _
    $region3: #{tpu_custom_call.1} parent=1 // pred_check_branch
      %23 = sbr.rel (0) target = $region5
    $region4: #{tpu_custom_call.1} parent=1 // pred_region
      %25 = vsyncadd [#allocation3], 0
      %s26 = sshll.u32 %s0, 4
      %s27 = int_to_ptr.hbm [resolvable:$true] %s26
      %s28 = sshll.u32 [#allocation2], 4
      %s29 = int_to_ptr.vmem [resolvable:$true] %s28
      %34 = dma.hbm_to_vmem [thread:$0]  %s27, 256, %s29, [#allocation3], 128, 128, 8
    $region5: #{tpu_custom_call.1} parent=1 // pred_fallthru
      _
    // Predicated region
    $region6: #{tpu_custom_call.1} parent=1 // pred_check
      _
    $region7: #{tpu_custom_call.1} parent=1 // pred_check_branch
      %36 = sbr.rel (0) target = $region9
    $region8: #{tpu_custom_call.1} parent=1 // pred_region
      %38 = vsyncadd [#allocation6], 0
      %s39 = sshll.u32 %s1, 4
      %s40 = int_to_ptr.hbm [resolvable:$true] %s39
      %s41 = sshll.u32 [#allocation5], 4
      %s42 = int_to_ptr.vmem [resolvable:$true] %s41
      %47 = dma.hbm_to_vmem [thread:$0]  %s40, 256, %s42, [#allocation6], 128, 128, 8
    $region9: #{tpu_custom_call.1} parent=1 // pred_fallthru
      _
    // Predicated region
    $region10: #{tpu_custom_call.1} parent=1 // pred_check
      _
    $region11: #{tpu_custom_call.1} parent=1 // pred_check_branch
      %49 = sbr.rel (0) target = $region13
    $region12: #{tpu_custom_call.1} parent=1 // pred_region
      %51 = vsyncadd [#allocation6], 0
      %s52 = sshll.u32 %s2, 4
      %s53 = int_to_ptr.hbm [resolvable:$true] %s52
      %s54 = sshll.u32 [#allocation7], 4
      %s55 = int_to_ptr.vmem [resolvable:$true] %s54
      %60 = dma.hbm_to_vmem [thread:$0]  %s53, 256, %s55, [#allocation6], 128, 128, 8
    $region13: #{tpu_custom_call.1} parent=1 // pred_fallthru
      _
    // Predicated region
    $region14: #{tpu_custom_call.1} parent=1 // pred_check
      _
    $region15: #{tpu_custom_call.1} parent=1 // pred_check_branch
      %62 = sbr.rel (0) target = $region17
    $region16: #{tpu_custom_call.1} parent=1 // pred_region
      %64 = vsyncadd [#allocation9], 0
      %s65 = sshll.u32 %s3, 4
      %s66 = int_to_ptr.hbm [resolvable:$true] %s65
      %s67 = sshll.u32 [#allocation8], 4
      %s68 = int_to_ptr.vmem [resolvable:$true] %s67
      %73 = dma.hbm_to_vmem [thread:$0]  %s66, 128, %s68, [#allocation9], 16, 16, 1
    $region17: #{tpu_custom_call.1} parent=1 // pred_fallthru
      _
    // Predicated region
    $region18: #{tpu_custom_call.1} parent=1 // pred_check
      _
    $region19: #{tpu_custom_call.1} parent=1 // pred_check_branch
      %75 = sbr.rel (0) target = $region21
    $region20: #{tpu_custom_call.1} parent=1 // pred_region
      %77 = vsyncadd [#allocation9], 0
      %s78 = sshll.u32 %s4, 4
      %s79 = int_to_ptr.hbm [resolvable:$true] %s78
      %s80 = sshll.u32 [#allocation10], 4
      %s81 = int_to_ptr.vmem [resolvable:$true] %s80
      %86 = dma.hbm_to_vmem [thread:$0]  %s79, 256, %s81, [#allocation9], 64, 64, 4
    $region21: #{tpu_custom_call.1} parent=1 // pred_fallthru
      _
    // Predicated region
    $region22: #{tpu_custom_call.1} parent=1 // pred_check
      _
    $region23: #{tpu_custom_call.1} parent=1 // pred_check_branch
      %88 = sbr.rel (0) target = $region25
    $region24: #{tpu_custom_call.1} parent=1 // pred_region
      _
    $region25: #{tpu_custom_call.1} parent=1 // pred_fallthru
      _
    // Predicated region
    $region26: #{tpu_custom_call.1} parent=1 // pred_check
      _
    $region27: #{tpu_custom_call.1} parent=1 // pred_check_branch
      %90 = sbr.rel (0) target = $region29
    $region28: #{tpu_custom_call.1} parent=1 // pred_region
      %92 = vsyncadd [#allocation12], 0
      %s93 = sshll.u32 %s6, 4
      %s94 = int_to_ptr.hbm [resolvable:$true] %s93
      %s95 = sshll.u32 [#allocation11], 4
      %s96 = int_to_ptr.vmem [resolvable:$true] %s95
      %101 = dma.hbm_to_vmem [thread:$0]  %s94, 256, %s96, [#allocation12], 64, 64, 4
    $region29: #{tpu_custom_call.1} parent=1 // pred_fallthru
      _
    // Predicated region
    $region30: #{tpu_custom_call.1} parent=1 // pred_check
      _
    $region31: #{tpu_custom_call.1} parent=1 // pred_check_branch
      %103 = sbr.rel (0) target = $region33
    $region32: #{tpu_custom_call.1} parent=1 // pred_region
      _
    $region33: #{tpu_custom_call.1} parent=1 // pred_fallthru
      _
    // Predicated region
    $region34: #{tpu_custom_call.1} parent=1 // pred_check
      _
    $region35: #{tpu_custom_call.1} parent=1 // pred_check_branch
      %105 = sbr.rel (0) target = $region37
    $region36: #{tpu_custom_call.1} parent=1 // pred_region
      %107 = vsyncadd [#allocation12], 0
      %s108 = sshll.u32 %s8, 4
      %s109 = int_to_ptr.hbm [resolvable:$true] %s108
      %s110 = sshll.u32 [#allocation13], 4
      %s111 = int_to_ptr.vmem [resolvable:$true] %s110
      %116 = dma.hbm_to_vmem [thread:$0]  %s109, 256, %s111, [#allocation12], 64, 64, 4
    $region37: #{tpu_custom_call.1} parent=1 // pred_fallthru
      _
    // Predicated region
    $region38: #{tpu_custom_call.1} parent=1 // pred_check
      _
    $region39: #{tpu_custom_call.1} parent=1 // pred_check_branch
      %118 = sbr.rel (0) target = $region41
    $region40: #{tpu_custom_call.1} parent=1 // pred_region
      _
    $region41: #{tpu_custom_call.1} parent=1 // pred_fallthru
      _
    // Predicated region
    $region42: #{tpu_custom_call.1} parent=1 // pred_check
      _
    $region43: #{tpu_custom_call.1} parent=1 // pred_check_branch
      %120 = sbr.rel (0) target = $region45
    $region44: #{tpu_custom_call.1} parent=1 // pred_region
      _
    $region45: #{tpu_custom_call.1} parent=1 // pred_fallthru
      _
    // Predicated region
    $region46: #{tpu_custom_call.1} parent=1 // pred_check
      _
    $region47: #{tpu_custom_call.1} parent=1 // pred_check_branch
      %122 = sbr.rel (0) target = $region49
    $region48: #{tpu_custom_call.1} parent=1 // pred_region
      _
    $region49: #{tpu_custom_call.1} parent=1 // pred_fallthru
      _
    // Predicated region
    $region50: #{tpu_custom_call.1} parent=1 // pred_check
      _
    $region51: #{tpu_custom_call.1} parent=1 // pred_check_branch
      %124 = sbr.rel (0) target = $region53
    $region52: #{tpu_custom_call.1} parent=1 // pred_region
      %126 = dma.done [#allocation3], 256
    $region53: #{tpu_custom_call.1} parent=1 // pred_fallthru
      _
    // Predicated region
    $region54: #{tpu_custom_call.1} parent=1 // pred_check
      _
    $region55: #{tpu_custom_call.1} parent=1 // pred_check_branch
      %128 = sbr.rel (0) target = $region57
    $region56: #{tpu_custom_call.1} parent=1 // pred_region
      %130 = dma.done [#allocation6], 256
    $region57: #{tpu_custom_call.1} parent=1 // pred_fallthru
      _
    // Predicated region
    $region58: #{tpu_custom_call.1} parent=1 // pred_check
      _
    $region59: #{tpu_custom_call.1} parent=1 // pred_check_branch
      %132 = sbr.rel (0) target = $region61
    $region60: #{tpu_custom_call.1} parent=1 // pred_region
      %134 = dma.done [#allocation6], 256
    $region61: #{tpu_custom_call.1} parent=1 // pred_fallthru
      _
    // Predicated region
    $region62: #{tpu_custom_call.1} parent=1 // pred_check
      _
    $region63: #{tpu_custom_call.1} parent=1 // pred_check_branch
      %136 = sbr.rel (0) target = $region65
    $region64: #{tpu_custom_call.1} parent=1 // pred_region
      %138 = dma.done [#allocation9], 128
    $region65: #{tpu_custom_call.1} parent=1 // pred_fallthru
      _
    // Predicated region
    $region66: #{tpu_custom_call.1} parent=1 // pred_check
      _
    $region67: #{tpu_custom_call.1} parent=1 // pred_check_branch
      %140 = sbr.rel (0) target = $region69
    $region68: #{tpu_custom_call.1} parent=1 // pred_region
      %142 = dma.done [#allocation9], 256
    $region69: #{tpu_custom_call.1} parent=1 // pred_fallthru
      _
    // Predicated region
    $region70: #{tpu_custom_call.1} parent=1 // pred_check
      _
    $region71: #{tpu_custom_call.1} parent=1 // pred_check_branch
      %144 = sbr.rel (0) target = $region73
    $region72: #{tpu_custom_call.1} parent=1 // pred_region
      %146 = dma.done [#allocation12], 256
    $region73: #{tpu_custom_call.1} parent=1 // pred_fallthru
      _
    // Predicated region
    $region74: #{tpu_custom_call.1} parent=1 // pred_check
      _
    $region75: #{tpu_custom_call.1} parent=1 // pred_check_branch
      %148 = sbr.rel (0) target = $region77
    $region76: #{tpu_custom_call.1} parent=1 // pred_region
      %150 = dma.done [#allocation12], 256
    $region77: #{tpu_custom_call.1} parent=1 // pred_fallthru
      _
    %v152 = vld [vmem:[#allocation2] sm:$0xff]
    %v153 = vld [vmem:[#allocation2 + $0x8] sm:$0xff]
    %v154 = vld [vmem:[#allocation5] sm:$0xff]
    %v155 = vld [vmem:[#allocation5 + $0x8] sm:$0xff]
    %v156 = vld [vmem:[#allocation7] sm:$0xff]
    %v157 = vld [vmem:[#allocation7 + $0x8] sm:$0xff]
    %v158 = vpack.c.bf16 %v153, %v152
    %v159 = vld [vmem:[#allocation10] sm:$0xf]
    %v160 = vld [vmem:[#allocation10 + $0x4] sm:$0xf]
    %v161 = vld [vmem:[#allocation10 + $0x8] sm:$0xf]
    %v162 = vld [vmem:[#allocation10 + $0xc] sm:$0xf]
    %v163 = vld [vmem:[%s5] sm:$0x1]
    %v165 = vperm.slane %v163, 0
    %v171 = vunpack.c.l.b16 %v159
    %v172 = vunpack.c.l.b16 %v160
    %v173 = vunpack.c.l.b16 %v161
    %v174 = vunpack.c.l.b16 %v162
    %v175 = vpack.c.b16 %v172, %v171
    %v176 = vpack.c.b16 %v174, %v173
    %vm179 = vcmask 261120
    %v181 = vsel %vm179, %v158, 0
    %183 = vmatpush.bf16.msra.mxu0 0
    %184 = vmatpush.bf16.msra.mxu0 0
    %185 = vmatpush.bf16.msra.mxu0 0
    %186 = vmatpush.bf16.msra.mxu0 0
    %187 = vmatpush.bf16.msra.mxu0 0
    %188 = vmatpush.bf16.msra.mxu0 0
    %189 = vmatpush.bf16.msra.mxu0 %v176
    %190 = vmatpush.bf16.msra.mxu0 %v175
    %191 = vmatmul.bf16.gmra.mxu0 %v181
    %v192 = vpop.f32.mrf.mxu0
    %v193 = vadd.f32 %v165, %v192
    %v194 = vpop.f32.mrf.mxu0
    %v195 = vadd.f32 %v165, %v194
    %196 = vdwg.mxu0
    %v197 = vpack.c.bf16 %v155, %v154
    %v198 = vld [vmem:[#allocation11] sm:$0xf]
    %v199 = vld [vmem:[#allocation11 + $0x4] sm:$0xf]
    %v200 = vld [vmem:[#allocation11 + $0x8] sm:$0xf]
    %v201 = vld [vmem:[#allocation11 + $0xc] sm:$0xf]
    %v202 = vld [vmem:[%s7] sm:$0x1]
    %v204 = vperm.slane %v202, 0
    %v210 = vunpack.c.l.b16 %v198
    %v211 = vunpack.c.l.b16 %v199
    %v212 = vunpack.c.l.b16 %v200
    %v213 = vunpack.c.l.b16 %v201
    %v214 = vpack.c.b16 %v211, %v210
    %v215 = vpack.c.b16 %v213, %v212
    %v219 = vsel %vm179, %v197, 0
    %221 = vmatpush.bf16.msra.mxu0 0
    %222 = vmatpush.bf16.msra.mxu0 0
    %223 = vmatpush.bf16.msra.mxu0 0
    %224 = vmatpush.bf16.msra.mxu0 0
    %225 = vmatpush.bf16.msra.mxu0 0
    %226 = vmatpush.bf16.msra.mxu0 0
    %227 = vmatpush.bf16.msra.mxu0 %v215
    %228 = vmatpush.bf16.msra.mxu0 %v214
    %229 = vmatmul.bf16.gmra.mxu0 %v219
    %v230 = vpop.f32.mrf.mxu0
    %v231 = vadd.f32 %v204, %v230
    %v232 = vpop.f32.mrf.mxu0
    %v233 = vadd.f32 %v204, %v232
    %234 = vdwg.mxu0
    %v235 = vpack.c.bf16 %v157, %v156
    %v236 = vld [vmem:[#allocation13] sm:$0xf]
    %v237 = vld [vmem:[#allocation13 + $0x4] sm:$0xf]
    %v238 = vld [vmem:[#allocation13 + $0x8] sm:$0xf]
    %v239 = vld [vmem:[#allocation13 + $0xc] sm:$0xf]
    %v240 = vld [vmem:[%s9] sm:$0x1]
    %v242 = vperm.slane %v240, 0
    %v248 = vunpack.c.l.b16 %v236
    %v249 = vunpack.c.l.b16 %v237
    %v250 = vunpack.c.l.b16 %v238
    %v251 = vunpack.c.l.b16 %v239
    %v252 = vpack.c.b16 %v249, %v248
    %v253 = vpack.c.b16 %v251, %v250
    %v257 = vsel %vm179, %v235, 0
    %259 = vmatpush.bf16.msra.mxu0 0
    %260 = vmatpush.bf16.msra.mxu0 0
    %261 = vmatpush.bf16.msra.mxu0 0
    %262 = vmatpush.bf16.msra.mxu0 0
    %263 = vmatpush.bf16.msra.mxu0 0
    %264 = vmatpush.bf16.msra.mxu0 0
    %265 = vmatpush.bf16.msra.mxu0 %v253
    %266 = vmatpush.bf16.msra.mxu0 %v252
    %267 = vmatmul.bf16.gmra.mxu0 %v257
    %v268 = vpop.f32.mrf.mxu0
    %v269 = vadd.f32 %v242, %v268
    %v270 = vpop.f32.mrf.mxu0
    %v271 = vadd.f32 %v242, %v270
    %272 = vdwg.mxu0
    %v273 = vmul.f32 %v193, 0.35355338
    %v274 = vmul.f32 %v195, 0.35355338
    %277 = vrot.lane.b32.xlu0 %v273, 120
    %v278 = vpop.permute.xlu0 %277
    %279 = vrot.lane.b32.xlu0 %v274, 120
    %v280 = vpop.permute.xlu0 %279
    %283 = vrot.lane.b32.xlu0 %v273, 112
    %v284 = vpop.permute.xlu0 %283
    %285 = vrot.lane.b32.xlu0 %v274, 112
    %v286 = vpop.permute.xlu0 %285
    %289 = vrot.lane.b32.xlu0 %v273, 104
    %v290 = vpop.permute.xlu0 %289
    %291 = vrot.lane.b32.xlu0 %v274, 104
    %v292 = vpop.permute.xlu0 %291
    %v295 = vpack.c.bf16 %v273, %v273
    %v296 = vpack.c.bf16 %v274, %v274
    %v297 = vpack.c.bf16 %v278, %v278
    %v298 = vpack.c.bf16 %v280, %v280
    %v299 = vpack.c.bf16 %v284, %v284
    %v300 = vpack.c.bf16 %v286, %v286
    %v301 = vpack.c.bf16 %v290, %v290
    %v302 = vpack.c.bf16 %v292, %v292
    %305 = vrot.lane.b32.xlu0 %v231, 120
    %v306 = vpop.permute.xlu0 %305
    %307 = vrot.lane.b32.xlu0 %v233, 120
    %v308 = vpop.permute.xlu0 %307
    %311 = vrot.lane.b32.xlu0 %v231, 112
    %v312 = vpop.permute.xlu0 %311
    %313 = vrot.lane.b32.xlu0 %v233, 112
    %v314 = vpop.permute.xlu0 %313
    %317 = vrot.lane.b32.xlu0 %v231, 104
    %v318 = vpop.permute.xlu0 %317
    %319 = vrot.lane.b32.xlu0 %v233, 104
    %v320 = vpop.permute.xlu0 %319
    %v323 = vpack.c.bf16 %v231, %v231
    %v324 = vpack.c.bf16 %v233, %v233
    %v325 = vpack.c.bf16 %v306, %v306
    %v326 = vpack.c.bf16 %v308, %v308
    %v327 = vpack.c.bf16 %v312, %v312
    %v328 = vpack.c.bf16 %v314, %v314
    %v329 = vpack.c.bf16 %v318, %v318
    %v330 = vpack.c.bf16 %v320, %v320
    %333 = vrot.lane.b32.xlu0 %v269, 120
    %v334 = vpop.permute.xlu0 %333
    %335 = vrot.lane.b32.xlu0 %v271, 120
    %v336 = vpop.permute.xlu0 %335
    %339 = vrot.lane.b32.xlu0 %v269, 112
    %v340 = vpop.permute.xlu0 %339
    %341 = vrot.lane.b32.xlu0 %v271, 112
    %v342 = vpop.permute.xlu0 %341
    %345 = vrot.lane.b32.xlu0 %v269, 104
    %v346 = vpop.permute.xlu0 %345
    %347 = vrot.lane.b32.xlu0 %v271, 104
    %v348 = vpop.permute.xlu0 %347
    %v351 = vpack.c.bf16 %v269, %v269
    %v352 = vpack.c.bf16 %v271, %v271
    %v353 = vpack.c.bf16 %v334, %v334
    %v354 = vpack.c.bf16 %v336, %v336
    %v355 = vpack.c.bf16 %v340, %v340
    %v356 = vpack.c.bf16 %v342, %v342
    %v357 = vpack.c.bf16 %v346, %v346
    %v358 = vpack.c.bf16 %v348, %v348
    %v359 = vld [vmem:[#allocation8] sm:$0x1]
    %v360 = vld [vmem:[#allocation8 + $0x1] sm:$0x1]
    %v361 = vld [vmem:[#allocation8 + $0x2] sm:$0x1]
    %v362 = vld [vmem:[#allocation8 + $0x3] sm:$0x1]
    %v363 = vld [vmem:[#allocation8 + $0x4] sm:$0x1]
    %v364 = vld [vmem:[#allocation8 + $0x5] sm:$0x1]
    %v365 = vld [vmem:[#allocation8 + $0x6] sm:$0x1]
    %v366 = vld [vmem:[#allocation8 + $0x7] sm:$0x1]
    %v375 = vperm.slane %v359, 0
    %v376 = vperm.slane %v360, 0
    %v377 = vperm.slane %v361, 0
    %v378 = vperm.slane %v362, 0
    %v379 = vperm.slane %v363, 0
    %v380 = vperm.slane %v364, 0
    %v381 = vperm.slane %v365, 0
    %v382 = vperm.slane %v366, 0
    %vm391 = vcmask 64512
    %v393 = vsel %vm391, %v295, 0
    %v396 = vsel %vm391, %v323, 0
    %398 = vmatpush.bf16.xpose.msra.mxu0 0
    %399 = vmatpush.bf16.xpose.msra.mxu0 0
    %400 = vmatpush.bf16.xpose.msra.mxu0 0
    %401 = vmatpush.bf16.xpose.msra.mxu0 0
    %402 = vmatpush.bf16.xpose.msra.mxu0 0
    %403 = vmatpush.bf16.xpose.msra.mxu0 0
    %404 = vmatpush.bf16.xpose.msra.mxu0 0
    %405 = vmatpush.bf16.xpose.msra.mxu0 %v396
    %406 = vmatmul.bf16.gmra.mxu0 %v393
    %v407 = vpop.f32.mrf.mxu0
    %v408 = vadd.f32 %v375, %v407
    %v409 = vpop.f32.mrf.mxu0
    %410 = vdwg.mxu0
    %v412 = vsel %vm391, %v296, 0
    %v415 = vsel %vm391, %v324, 0
    %417 = vmatpush.bf16.xpose.msra.mxu0 0
    %418 = vmatpush.bf16.xpose.msra.mxu0 0
    %419 = vmatpush.bf16.xpose.msra.mxu0 0
    %420 = vmatpush.bf16.xpose.msra.mxu0 0
    %421 = vmatpush.bf16.xpose.msra.mxu0 0
    %422 = vmatpush.bf16.xpose.msra.mxu0 0
    %423 = vmatpush.bf16.xpose.msra.mxu0 0
    %424 = vmatpush.bf16.xpose.msra.mxu0 %v415
    %425 = vmatmul.bf16.gmra.mxu0 %v412
    %v426 = vpop.f32.mrf.mxu0
    %v427 = vadd.f32 %v376, %v426
    %v428 = vpop.f32.mrf.mxu0
    %429 = vdwg.mxu0
    %v431 = vsel %vm391, %v297, 0
    %v434 = vsel %vm391, %v325, 0
    %436 = vmatpush.bf16.xpose.msra.mxu0 0
    %437 = vmatpush.bf16.xpose.msra.mxu0 0
    %438 = vmatpush.bf16.xpose.msra.mxu0 0
    %439 = vmatpush.bf16.xpose.msra.mxu0 0
    %440 = vmatpush.bf16.xpose.msra.mxu0 0
    %441 = vmatpush.bf16.xpose.msra.mxu0 0
    %442 = vmatpush.bf16.xpose.msra.mxu0 0
    %443 = vmatpush.bf16.xpose.msra.mxu0 %v434
    %444 = vmatmul.bf16.gmra.mxu0 %v431
    %v445 = vpop.f32.mrf.mxu0
    %v446 = vadd.f32 %v377, %v445
    %v447 = vpop.f32.mrf.mxu0
    %448 = vdwg.mxu0
    %v450 = vsel %vm391, %v298, 0
    %v453 = vsel %vm391, %v326, 0
    %455 = vmatpush.bf16.xpose.msra.mxu0 0
    %456 = vmatpush.bf16.xpose.msra.mxu0 0
    %457 = vmatpush.bf16.xpose.msra.mxu0 0
    %458 = vmatpush.bf16.xpose.msra.mxu0 0
    %459 = vmatpush.bf16.xpose.msra.mxu0 0
    %460 = vmatpush.bf16.xpose.msra.mxu0 0
    %461 = vmatpush.bf16.xpose.msra.mxu0 0
    %462 = vmatpush.bf16.xpose.msra.mxu0 %v453
    %463 = vmatmul.bf16.gmra.mxu0 %v450
    %v464 = vpop.f32.mrf.mxu0
    %v465 = vadd.f32 %v378, %v464
    %v466 = vpop.f32.mrf.mxu0
    %467 = vdwg.mxu0
    %v469 = vsel %vm391, %v299, 0
    %v472 = vsel %vm391, %v327, 0
    %474 = vmatpush.bf16.xpose.msra.mxu0 0
    %475 = vmatpush.bf16.xpose.msra.mxu0 0
    %476 = vmatpush.bf16.xpose.msra.mxu0 0
    %477 = vmatpush.bf16.xpose.msra.mxu0 0
    %478 = vmatpush.bf16.xpose.msra.mxu0 0
    %479 = vmatpush.bf16.xpose.msra.mxu0 0
    %480 = vmatpush.bf16.xpose.msra.mxu0 0
    %481 = vmatpush.bf16.xpose.msra.mxu0 %v472
    %482 = vmatmul.bf16.gmra.mxu0 %v469
    %v483 = vpop.f32.mrf.mxu0
    %v484 = vadd.f32 %v379, %v483
    %v485 = vpop.f32.mrf.mxu0
    %486 = vdwg.mxu0
    %v488 = vsel %vm391, %v300, 0
    %v491 = vsel %vm391, %v328, 0
    %493 = vmatpush.bf16.xpose.msra.mxu0 0
    %494 = vmatpush.bf16.xpose.msra.mxu0 0
    %495 = vmatpush.bf16.xpose.msra.mxu0 0
    %496 = vmatpush.bf16.xpose.msra.mxu0 0
    %497 = vmatpush.bf16.xpose.msra.mxu0 0
    %498 = vmatpush.bf16.xpose.msra.mxu0 0
    %499 = vmatpush.bf16.xpose.msra.mxu0 0
    %500 = vmatpush.bf16.xpose.msra.mxu0 %v491
    %501 = vmatmul.bf16.gmra.mxu0 %v488
    %v502 = vpop.f32.mrf.mxu0
    %v503 = vadd.f32 %v380, %v502
    %v504 = vpop.f32.mrf.mxu0
    %505 = vdwg.mxu0
    %v507 = vsel %vm391, %v301, 0
    %v510 = vsel %vm391, %v329, 0
    %512 = vmatpush.bf16.xpose.msra.mxu0 0
    %513 = vmatpush.bf16.xpose.msra.mxu0 0
    %514 = vmatpush.bf16.xpose.msra.mxu0 0
    %515 = vmatpush.bf16.xpose.msra.mxu0 0
    %516 = vmatpush.bf16.xpose.msra.mxu0 0
    %517 = vmatpush.bf16.xpose.msra.mxu0 0
    %518 = vmatpush.bf16.xpose.msra.mxu0 0
    %519 = vmatpush.bf16.xpose.msra.mxu0 %v510
    %520 = vmatmul.bf16.gmra.mxu0 %v507
    %v521 = vpop.f32.mrf.mxu0
    %v522 = vadd.f32 %v381, %v521
    %v523 = vpop.f32.mrf.mxu0
    %524 = vdwg.mxu0
    %v526 = vsel %vm391, %v302, 0
    %v529 = vsel %vm391, %v330, 0
    %531 = vmatpush.bf16.xpose.msra.mxu0 0
    %532 = vmatpush.bf16.xpose.msra.mxu0 0
    %533 = vmatpush.bf16.xpose.msra.mxu0 0
    %534 = vmatpush.bf16.xpose.msra.mxu0 0
    %535 = vmatpush.bf16.xpose.msra.mxu0 0
    %536 = vmatpush.bf16.xpose.msra.mxu0 0
    %537 = vmatpush.bf16.xpose.msra.mxu0 0
    %538 = vmatpush.bf16.xpose.msra.mxu0 %v529
    %539 = vmatmul.bf16.gmra.mxu0 %v526
    %v540 = vpop.f32.mrf.mxu0
    %v541 = vadd.f32 %v382, %v540
    %v542 = vpop.f32.mrf.mxu0
    %543 = vdwg.mxu0
    %v544 = vsel %vm391, %v408, -inf
    %545 = vmax.xlane.f32.xlu0 %v544
    %v546 = vpop.xlane.xlu0 %545
    %v547 = vsel %vm391, %v427, -inf
    %548 = vmax.xlane.f32.xlu0 %v547
    %v549 = vpop.xlane.xlu0 %548
    %v550 = vsel %vm391, %v446, -inf
    %551 = vmax.xlane.f32.xlu0 %v550
    %v552 = vpop.xlane.xlu0 %551
    %v553 = vsel %vm391, %v465, -inf
    %554 = vmax.xlane.f32.xlu0 %v553
    %v555 = vpop.xlane.xlu0 %554
    %v556 = vsel %vm391, %v484, -inf
    %557 = vmax.xlane.f32.xlu0 %v556
    %v558 = vpop.xlane.xlu0 %557
    %v559 = vsel %vm391, %v503, -inf
    %560 = vmax.xlane.f32.xlu0 %v559
    %v561 = vpop.xlane.xlu0 %560
    %v562 = vsel %vm391, %v522, -inf
    %563 = vmax.xlane.f32.xlu0 %v562
    %v564 = vpop.xlane.xlu0 %563
    %v565 = vsel %vm391, %v541, -inf
    %566 = vmax.xlane.f32.xlu0 %v565
    %v567 = vpop.xlane.xlu0 %566
    %v568 = vsub.f32 %v408, %v546
    %v569 = vsub.f32 %v427, %v549
    %v570 = vsub.f32 %v446, %v552
    %v571 = vsub.f32 %v465, %v555
    %v572 = vsub.f32 %v484, %v558
    %v573 = vsub.f32 %v503, %v561
    %v574 = vsub.f32 %v522, %v564
    %v575 = vsub.f32 %v541, %v567
    %v576 = vmul.f32 %v568, 1.442695
    %v577 = vpow.pop %v576
    %v578 = vmul.f32 %v569, 1.442695
    %v579 = vpow.pop %v578
    %v580 = vmul.f32 %v570, 1.442695
    %v581 = vpow.pop %v580
    %v582 = vmul.f32 %v571, 1.442695
    %v583 = vpow.pop %v582
    %v584 = vmul.f32 %v572, 1.442695
    %v585 = vpow.pop %v584
    %v586 = vmul.f32 %v573, 1.442695
    %v587 = vpow.pop %v586
    %v588 = vmul.f32 %v574, 1.442695
    %v589 = vpow.pop %v588
    %v590 = vmul.f32 %v575, 1.442695
    %v591 = vpow.pop %v590
    %v592 = vsel %vm391, %v577, 0.0
    %593 = vadd.xlane.f32.xlu0 %v592
    %v594 = vpop.xlane.xlu0 %593
    %v595 = vsel %vm391, %v579, 0.0
    %596 = vadd.xlane.f32.xlu0 %v595
    %v597 = vpop.xlane.xlu0 %596
    %v598 = vsel %vm391, %v581, 0.0
    %599 = vadd.xlane.f32.xlu0 %v598
    %v600 = vpop.xlane.xlu0 %599
    %v601 = vsel %vm391, %v583, 0.0
    %602 = vadd.xlane.f32.xlu0 %v601
    %v603 = vpop.xlane.xlu0 %602
    %v604 = vsel %vm391, %v585, 0.0
    %605 = vadd.xlane.f32.xlu0 %v604
    %v606 = vpop.xlane.xlu0 %605
    %v607 = vsel %vm391, %v587, 0.0
    %608 = vadd.xlane.f32.xlu0 %v607
    %v609 = vpop.xlane.xlu0 %608
    %v610 = vsel %vm391, %v589, 0.0
    %611 = vadd.xlane.f32.xlu0 %v610
    %v612 = vpop.xlane.xlu0 %611
    %v613 = vsel %vm391, %v591, 0.0
    %614 = vadd.xlane.f32.xlu0 %v613
    %v615 = vpop.xlane.xlu0 %614
    %v616 = vpack.c.bf16 %v577, %v577
    %v617 = vpack.c.bf16 %v579, %v579
    %v618 = vpack.c.bf16 %v581, %v581
    %v619 = vpack.c.bf16 %v583, %v583
    %v620 = vpack.c.bf16 %v585, %v585
    %v621 = vpack.c.bf16 %v587, %v587
    %v622 = vpack.c.bf16 %v589, %v589
    %v623 = vpack.c.bf16 %v591, %v591
    %v625 = vsel %vm391, %v616, 0
    %vm627 = vcmask 1043456
    %v629 = vsel %vm627, %v351, 0
    %631 = vmatpush.bf16.msra.mxu0 0
    %632 = vmatpush.bf16.msra.mxu0 0
    %633 = vmatpush.bf16.msra.mxu0 0
    %634 = vmatpush.bf16.msra.mxu0 0
    %635 = vmatpush.bf16.msra.mxu0 0
    %636 = vmatpush.bf16.msra.mxu0 0
    %637 = vmatpush.bf16.msra.mxu0 0
    %638 = vmatpush.bf16.msra.mxu0 %v629
    %639 = vmatmul.bf16.gmra.mxu0 %v625
    %v640 = vpop.f32.mrf.mxu0
    %v641 = vadd.f32 0.0, %v640
    %v642 = vpop.f32.mrf.mxu0
    %643 = vdwg.mxu0
    %v645 = vsel %vm391, %v617, 0
    %v648 = vsel %vm627, %v352, 0
    %650 = vmatpush.bf16.msra.mxu0 0
    %651 = vmatpush.bf16.msra.mxu0 0
    %652 = vmatpush.bf16.msra.mxu0 0
    %653 = vmatpush.bf16.msra.mxu0 0
    %654 = vmatpush.bf16.msra.mxu0 0
    %655 = vmatpush.bf16.msra.mxu0 0
    %656 = vmatpush.bf16.msra.mxu0 0
    %657 = vmatpush.bf16.msra.mxu0 %v648
    %658 = vmatmul.bf16.gmra.mxu0 %v645
    %v659 = vpop.f32.mrf.mxu0
    %v660 = vadd.f32 0.0, %v659
    %v661 = vpop.f32.mrf.mxu0
    %662 = vdwg.mxu0
    %v664 = vsel %vm391, %v618, 0
    %v667 = vsel %vm627, %v353, 0
    %669 = vmatpush.bf16.msra.mxu0 0
    %670 = vmatpush.bf16.msra.mxu0 0
    %671 = vmatpush.bf16.msra.mxu0 0
    %672 = vmatpush.bf16.msra.mxu0 0
    %673 = vmatpush.bf16.msra.mxu0 0
    %674 = vmatpush.bf16.msra.mxu0 0
    %675 = vmatpush.bf16.msra.mxu0 0
    %676 = vmatpush.bf16.msra.mxu0 %v667
    %677 = vmatmul.bf16.gmra.mxu0 %v664
    %v678 = vpop.f32.mrf.mxu0
    %v679 = vadd.f32 0.0, %v678
    %v680 = vpop.f32.mrf.mxu0
    %681 = vdwg.mxu0
    %v683 = vsel %vm391, %v619, 0
    %v686 = vsel %vm627, %v354, 0
    %688 = vmatpush.bf16.msra.mxu0 0
    %689 = vmatpush.bf16.msra.mxu0 0
    %690 = vmatpush.bf16.msra.mxu0 0
    %691 = vmatpush.bf16.msra.mxu0 0
    %692 = vmatpush.bf16.msra.mxu0 0
    %693 = vmatpush.bf16.msra.mxu0 0
    %694 = vmatpush.bf16.msra.mxu0 0
    %695 = vmatpush.bf16.msra.mxu0 %v686
    %696 = vmatmul.bf16.gmra.mxu0 %v683
    %v697 = vpop.f32.mrf.mxu0
    %v698 = vadd.f32 0.0, %v697
    %v699 = vpop.f32.mrf.mxu0
    %700 = vdwg.mxu0
    %v702 = vsel %vm391, %v620, 0
    %v705 = vsel %vm627, %v355, 0
    %707 = vmatpush.bf16.msra.mxu0 0
    %708 = vmatpush.bf16.msra.mxu0 0
    %709 = vmatpush.bf16.msra.mxu0 0
    %710 = vmatpush.bf16.msra.mxu0 0
    %711 = vmatpush.bf16.msra.mxu0 0
    %712 = vmatpush.bf16.msra.mxu0 0
    %713 = vmatpush.bf16.msra.mxu0 0
    %714 = vmatpush.bf16.msra.mxu0 %v705
    %715 = vmatmul.bf16.gmra.mxu0 %v702
    %v716 = vpop.f32.mrf.mxu0
    %v717 = vadd.f32 0.0, %v716
    %v718 = vpop.f32.mrf.mxu0
    %719 = vdwg.mxu0
    %v721 = vsel %vm391, %v621, 0
    %v724 = vsel %vm627, %v356, 0
    %726 = vmatpush.bf16.msra.mxu0 0
    %727 = vmatpush.bf16.msra.mxu0 0
    %728 = vmatpush.bf16.msra.mxu0 0
    %729 = vmatpush.bf16.msra.mxu0 0
    %730 = vmatpush.bf16.msra.mxu0 0
    %731 = vmatpush.bf16.msra.mxu0 0
    %732 = vmatpush.bf16.msra.mxu0 0
    %733 = vmatpush.bf16.msra.mxu0 %v724
    %734 = vmatmul.bf16.gmra.mxu0 %v721
    %v735 = vpop.f32.mrf.mxu0
    %v736 = vadd.f32 0.0, %v735
    %v737 = vpop.f32.mrf.mxu0
    %738 = vdwg.mxu0
    %v740 = vsel %vm391, %v622, 0
    %v743 = vsel %vm627, %v357, 0
    %745 = vmatpush.bf16.msra.mxu0 0
    %746 = vmatpush.bf16.msra.mxu0 0
    %747 = vmatpush.bf16.msra.mxu0 0
    %748 = vmatpush.bf16.msra.mxu0 0
    %749 = vmatpush.bf16.msra.mxu0 0
    %750 = vmatpush.bf16.msra.mxu0 0
    %751 = vmatpush.bf16.msra.mxu0 0
    %752 = vmatpush.bf16.msra.mxu0 %v743
    %753 = vmatmul.bf16.gmra.mxu0 %v740
    %v754 = vpop.f32.mrf.mxu0
    %v755 = vadd.f32 0.0, %v754
    %v756 = vpop.f32.mrf.mxu0
    %757 = vdwg.mxu0
    %v759 = vsel %vm391, %v623, 0
    %v762 = vsel %vm627, %v358, 0
    %764 = vmatpush.bf16.msra.mxu0 0
    %765 = vmatpush.bf16.msra.mxu0 0
    %766 = vmatpush.bf16.msra.mxu0 0
    %767 = vmatpush.bf16.msra.mxu0 0
    %768 = vmatpush.bf16.msra.mxu0 0
    %769 = vmatpush.bf16.msra.mxu0 0
    %770 = vmatpush.bf16.msra.mxu0 0
    %771 = vmatpush.bf16.msra.mxu0 %v762
    %772 = vmatmul.bf16.gmra.mxu0 %v759
    %v773 = vpop.f32.mrf.mxu0
    %v774 = vadd.f32 0.0, %v773
    %v775 = vpop.f32.mrf.mxu0
    %776 = vdwg.mxu0
    %v777 = vrcp.pop %v594
    %v778 = vrcp.pop %v597
    %v779 = vrcp.pop %v600
    %v780 = vrcp.pop %v603
    %v781 = vrcp.pop %v606
    %v782 = vrcp.pop %v609
    %v783 = vrcp.pop %v612
    %v784 = vrcp.pop %v615
    %v785 = vmul.f32 %v641, %v777
    %v786 = vmul.f32 %v660, %v778
    %v787 = vmul.f32 %v679, %v779
    %v788 = vmul.f32 %v698, %v780
    %v789 = vmul.f32 %v717, %v781
    %v790 = vmul.f32 %v736, %v782
    %v791 = vmul.f32 %v755, %v783
    %v792 = vmul.f32 %v774, %v784
    %795 = vrot.lane.b32.xlu0 %v787, 8
    %v796 = vpop.permute.xlu0 %795
    %797 = vrot.lane.b32.xlu0 %v788, 8
    %v798 = vpop.permute.xlu0 %797
    %803 = vrot.lane.b32.xlu0 %v789, 16
    %v804 = vpop.permute.xlu0 %803
    %805 = vrot.lane.b32.xlu0 %v790, 16
    %v806 = vpop.permute.xlu0 %805
    %811 = vrot.lane.b32.xlu0 %v791, 24
    %v812 = vpop.permute.xlu0 %811
    %813 = vrot.lane.b32.xlu0 %v792, 24
    %v814 = vpop.permute.xlu0 %813
    %v817 = vsel %vm391, %v785, %v796
    %v818 = vsel %vm391, %v786, %v798
    %vm819 = vcmask 130048
    %v820 = vsel %vm819, %v817, %v804
    %v821 = vsel %vm819, %v818, %v806
    %vm822 = vcmask 195584
    %v823 = vsel %vm822, %v820, %v812
    %v824 = vsel %vm822, %v821, %v814
    %v825 = vadd.f32 %v823, %v152
    %v826 = vadd.f32 %v824, %v153
    %v827 = vsel %vm179, %v825, 0.0
    %828 = vadd.xlane.f32.xlu0 %v827
    %v829 = vpop.xlane.xlu0 %828
    %v830 = vsel %vm179, %v826, 0.0
    %831 = vadd.xlane.f32.xlu0 %v830
    %v832 = vpop.xlane.xlu0 %831
    %v833 = vrcp.pop 32.0
    %v834 = vmul.f32 32.0, %v833
    %v835 = vsub.f32 1.0, %v834
    %v836 = vmul.f32 %v833, %v835
    %v837 = vadd.f32 %v833, %v836
    %vm838 = vweird.f32 %v833
    %v839 = vsel %vm838, %v833, %v837
    %v840 = vmul.f32 %v829, %v839
    %v841 = vmul.f32 %v832, %v839
    %v842 = vsub.f32 %v825, %v840
    %v843 = vsub.f32 %v826, %v841
    %v844 = vmul.f32 %v842, %v842
    %v845 = vmul.f32 %v843, %v843
    %v846 = vsel %vm179, %v844, 0.0
    %847 = vadd.xlane.f32.xlu0 %v846
    %v848 = vpop.xlane.xlu0 %847
    %v849 = vsel %vm179, %v845, 0.0
    %850 = vadd.xlane.f32.xlu0 %v849
    %v851 = vpop.xlane.xlu0 %850
    %v852 = vmul.f32 %v848, %v839
    %v853 = vmul.f32 %v851, %v839
    %v854 = vadd.f32 %v852, 1e-05
    %v855 = vadd.f32 %v853, 1e-05
    %v856 = vrsqrt.pop %v854
    %v857 = vmul.f32 %v856, %v854
    %v858 = vmul.f32 %v857, %v856
    %v859 = vmul.f32 0.5, %v858
    %v860 = vsub.f32 1.5, %v859
    %v861 = vmul.f32 %v856, %v860
    %vm862 = vweird.f32 %v854
    %vm863 = vweird.f32 %v856
    %vm864 = vmor %vm862, %vm863
    %v865 = vsel %vm864, %v856, %v861
    %v866 = vrsqrt.pop %v855
    %v867 = vmul.f32 %v866, %v855
    %v868 = vmul.f32 %v867, %v866
    %v869 = vmul.f32 0.5, %v868
    %v870 = vsub.f32 1.5, %v869
    %v871 = vmul.f32 %v866, %v870
    %vm872 = vweird.f32 %v855
    %vm873 = vweird.f32 %v866
    %vm874 = vmor %vm872, %vm873
    %v875 = vsel %vm874, %v866, %v871
    %v876 = vmul.f32 %v842, %v865
    %v877 = vmul.f32 %v843, %v875
    %v878 = vld [vmem:[%s10] sm:$0x1]
    %v880 = vperm.slane %v878, 0
    %v882 = vmul.f32 %v876, %v880
    %v883 = vmul.f32 %v877, %v880
    %v884 = vld [vmem:[%s11] sm:$0x1]
    %v886 = vperm.slane %v884, 0
    %v888 = vadd.f32 %v882, %v886
    %v889 = vadd.f32 %v883, %v886
    %890 = vst.msk [vmem:[#allocation14] sm:$0xff] %vm179, %v888
    %891 = vst.msk [vmem:[#allocation14 + $0x8] sm:$0xff] %vm179, %v889
    // Predicated region
    $region78: #{tpu_custom_call.1} parent=1 // pred_check
      _
    $region79: #{tpu_custom_call.1} parent=1 // pred_check_branch
      %893 = sbr.rel (0) target = $region81
    $region80: #{tpu_custom_call.1} parent=1 // pred_region
      %895 = vsyncadd [#allocation4], 0
      %s896 = sshll.u32 [#allocation14], 4
      %s897 = int_to_ptr.vmem [resolvable:$true] %s896
      %s898 = sshll.u32 %s12, 4
      %s899 = int_to_ptr.hbm [resolvable:$true] %s898
      %904 = dma.vmem_to_hbm [thread:$0]  %s897, 256, %s899, [#allocation4], 128, 128, 8
    $region81: #{tpu_custom_call.1} parent=1 // pred_fallthru
      _
    // Predicated region
    $region82: #{tpu_custom_call.1} parent=1 // pred_check
      _
    $region83: #{tpu_custom_call.1} parent=1 // pred_check_branch
      %906 = sbr.rel (0) target = $region85
    $region84: #{tpu_custom_call.1} parent=1 // pred_region
      %908 = dma.done [#allocation4], 256
    $region85: #{tpu_custom_call.1} parent=1 // pred_fallthru
      _
    %909 = vsyncpa [#allocation3], 1
    %910 = vsyncpa [#allocation6], 1
    %911 = vsyncpa [#allocation9], 1
    %912 = vsyncpa [#allocation12], 1
    %913 = vsyncpa [#allocation4], 1

</llo_original>
